<compile_context>
chip_gen: v7x
topology: tpu7x:2x2x1
jax: 0.10.0
libtpu: 0.0.40
codegen_flags: <defaults>
</compile_context>

<pallas_src>
import functools
import math

import jax
import jax.numpy as jnp
from jax.experimental import pallas as pl
from jax.experimental.pallas import tpu as pltpu


_EPS = 1e-5


def _vmem_budget():
    """(target block bytes, vmem_limit_bytes) sized per TPU generation."""
    try:
        cap = pltpu.get_tpu_info().vmem_capacity_bytes
    except Exception:  # unknown part: assume the smallest (v7x: 64 MiB VMEM)
        cap = 64 * 1024 * 1024
    if cap >= 128 * 1024 * 1024:                      # v5e / v6e
        return 4 * 1024 * 1024, 64 * 1024 * 1024
    return 2 * 1024 * 1024, 36 * 1024 * 1024          # v7x / unknown


def _pick_rows(total_rows, row_bytes, target_bytes):
    """Largest row tile (multiple of 8) keeping one block under target_bytes."""
    rows = max(8, (target_bytes // max(row_bytes, 1)) // 8 * 8)
    return total_rows if rows >= total_rows else rows


def _seg_mean(v, s, inv_c):
    """Per-segment mean of f32 `v` via two single-pass bf16 MXU matmuls.

    `s` is the (L, L) bf16 block-diagonal ones matrix: lane j of the result is
    the mean of v over the lanes in j's segment, i.e. the per-token statistic
    already broadcast back across that token's own C lanes.  Splitting v into
    bf16 hi/lo parts keeps the reduction accurate to ~2^-17 relative error
    without relying on multi-pass f32 matmul emulation.
    """
    hi = v.astype(jnp.bfloat16)
    lo = (v - hi.astype(jnp.float32)).astype(jnp.bfloat16)
    acc = jnp.dot(hi, s, preferred_element_type=jnp.float32)
    acc = acc + jnp.dot(lo, s, preferred_element_type=jnp.float32)
    return acc * inv_c


def _ln_packed_kernel(x_ref, s_ref, w_ref, o_ref, *, inv_c):
    """k tokens per row, each spanning C lanes; stats via MXU segmented reduce."""
    x = x_ref[...].astype(jnp.float32)
    s = s_ref[...]                                     # (L, L) bf16 block-diag ones
    mu = _seg_mean(x, s, inv_c)                        # (R, L), broadcast per token
    d = x - mu
    var = jnp.maximum(_seg_mean(d * d, s, inv_c), 0.0)  # two-pass, clamped >= 0
    inv = jax.lax.rsqrt(var + _EPS)
    w = w_ref[...].astype(jnp.float32)                 # (1, L): weight tiled k times
    o_ref[...] = (x * inv * w).astype(o_ref.dtype)


def _ln_row_kernel(x_ref, w_ref, o_ref):
    """One token per row; reduce over the (full) last axis."""
    x = x_ref[...].astype(jnp.float32)
    mu = jnp.mean(x, axis=-1, keepdims=True)
    d = x - mu
    var = jnp.mean(d * d, axis=-1, keepdims=True)      # two-pass, always >= 0
    inv = jax.lax.rsqrt(var + _EPS)
    w = w_ref[...].astype(jnp.float32)
    o_ref[...] = (x * inv * w).astype(o_ref.dtype)


def biasfree_layernorm(x, weight, *, block_bytes=None):
    """x: (..., C), weight: (C,).  Returns an array with x's shape and dtype."""
    orig_shape = x.shape
    C = orig_shape[-1]
    assert weight.shape == (C,), (weight.shape, C)

    x2 = x.reshape(-1, C)                              # (tokens, channels), contiguous
    M = x2.shape[0]
    itemsize = jnp.dtype(x.dtype).itemsize

    target_bytes, vmem_limit = _vmem_budget()
    if block_bytes is not None:
        target_bytes = block_bytes
    cparams = pltpu.CompilerParams(
        dimension_semantics=("parallel",),             # megacore: shard row-blocks
        vmem_limit_bytes=vmem_limit,
    )

    # Lane-packing factor: k tokens per packed row so that k*C % 128 == 0.
    k = 128 // math.gcd(C, 128)
    L = k * C
    use_packed = (C % 128 != 0) and (M % k == 0) and (M >= k) and (L <= 512)

    if use_packed:
        Mp = M // k
        xp = x2.reshape(Mp, L)                         # zero-copy row-major repack
        seg = jnp.arange(L, dtype=jnp.int32) // C
        s_mat = (seg[:, None] == seg[None, :]).astype(jnp.bfloat16)  # block-diag ones
        w_tiled = jnp.tile(weight, k).reshape(1, L)    # lane-dense tiled weight
        rows = _pick_rows(Mp, L * itemsize, target_bytes)
        out = pl.pallas_call(
            functools.partial(_ln_packed_kernel, inv_c=1.0 / C),
            out_shape=jax.ShapeDtypeStruct((Mp, L), x.dtype),
            grid=(pl.cdiv(Mp, rows),),
            in_specs=[
                pl.BlockSpec((rows, L), lambda i: (i, 0)),
                pl.BlockSpec((L, L), lambda i: (0, 0)),   # constant block: fetched once
                pl.BlockSpec((1, L), lambda i: (0, 0)),
            ],
            out_specs=pl.BlockSpec((rows, L), lambda i: (i, 0)),
            compiler_params=cparams,
        )(xp, s_mat, w_tiled)
        return out.reshape(orig_shape)

    # Streaming (rows, C) path: lane-dense when C % 128 == 0; otherwise the
    # correct single-HBM-pass fallback (masked stores) for shapes that cannot
    # be lane-packed without a copy (M % k != 0, or awkward C with k*C > 512).
    rows = _pick_rows(M, C * itemsize, target_bytes)
    out = pl.pallas_call(
        _ln_row_kernel,
        out_shape=jax.ShapeDtypeStruct((M, C), x.dtype),
        grid=(pl.cdiv(M, rows),),
        in_specs=[
            pl.BlockSpec((rows, C), lambda i: (i, 0)),
            pl.BlockSpec((1, C), lambda i: (0, 0)),
        ],
        out_specs=pl.BlockSpec((rows, C), lambda i: (i, 0)),
        compiler_params=cparams,
    )(x2, weight.reshape(1, C))
    return out.reshape(orig_shape)


def _reference(x, weight):
    sigma = jnp.var(x, axis=-1, keepdims=True)         # unbiased=False
    return x / jnp.sqrt(sigma + _EPS) * weight


if __name__ == "__main__":
    key = jax.random.PRNGKey(0)
    ks = jax.random.split(key, 10)

    def _check(x, w, name, **kw):
        y = jax.block_until_ready(biasfree_layernorm(x, w, **kw))
        ref = _reference(x, w)
        assert y.shape == x.shape and y.dtype == x.dtype, name
        assert jnp.allclose(y, ref, atol=1e-4, rtol=1e-4), f"mismatch vs reference: {name}"

    # tsdn usage: x is (B, H*W, C) after to_3d.  C=32 is a tsdn width;
    # M = 2*64 = 128 is divisible by k=4 -> lane-packed MXU path.  The +2.0
    # offset exercises the mean-heavy regime (no cancellation / NaN).
    x = 2.0 + jax.random.normal(ks[0], (2, 64, 32), dtype=jnp.float32)
    w = 1.0 + 0.05 * jax.random.normal(ks[1], (32,), dtype=jnp.float32)
    _check(x, w, "C=32 packed")

    # C=96 (another tsdn width): k=4, L=384, M = 2*50 divisible by 4 -> packed.
    x = jax.random.normal(ks[2], (2, 50, 96), dtype=jnp.float32)
    w = 1.0 + 0.05 * jax.random.normal(ks[3], (96,), dtype=jnp.float32)
    _check(x, w, "C=96 packed")

    # C=48, M = 2*27 = 54 not divisible by k=8 -> row fallback (masked stores).
    x = jax.random.normal(ks[4], (2, 27, 48), dtype=jnp.float32)
    w = 1.0 + 0.05 * jax.random.normal(ks[5], (48,), dtype=jnp.float32)
    _check(x, w, "C=48 fallback")
    # Same data, tiny forced block -> multi-step ragged grid on the row path.
    _check(x, w, "C=48 fallback, ragged multi-block", block_bytes=4 * 1024)

    # C=128 -> lane-aligned streaming path.
    x = jax.random.normal(ks[6], (2, 40, 128), dtype=jnp.float32)
    w = 1.0 + 0.05 * jax.random.normal(ks[7], (128,), dtype=jnp.float32)
    _check(x, w, "C=128 aligned")

    # Multi-step ragged grid on the packed path (tiny forced block size):
    # Mp = 100 packed rows with 32-row tiles -> 4 grid steps, last one masked.
    x = jax.random.normal(ks[8], (2, 200, 32), dtype=jnp.float32)
    w = 1.0 + 0.05 * jax.random.normal(ks[9], (32,), dtype=jnp.float32)
    _check(x, w, "C=32 packed, ragged multi-block", block_bytes=16 * 1024)

    print("KERNEL_OK")
</pallas_src>

<mosaic_0001>
module attributes {stable_mosaic.version = 11 : i64} {
  func.func @_ln_packed_kernel(%arg0: i32, %arg1: memref<32x128xf32, #tpu.memory_space<vmem>>, %arg2: memref<128x128xbf16, #tpu.memory_space<vmem>>, %arg3: memref<1x128xf32, #tpu.memory_space<vmem>>, %arg4: memref<32x128xf32, #tpu.memory_space<vmem>>) attributes {dimension_semantics = [#tpu.dimension_semantics<parallel>], iteration_bounds = array<i64: 1>, scalar_prefetch = 0 : i64, scratch_operands = 0 : i64, tpu.core_type = #tpu.core_type<tc>, window_params = [{transform_indices = @transform_0, window_bounds = array<i64: 32, 128>}, {pipeline_mode = #tpu.pipeline_mode<synchronous>, transform_indices = @transform_1, window_bounds = array<i64: 128, 128>}, {pipeline_mode = #tpu.pipeline_mode<synchronous>, transform_indices = @transform_2, window_bounds = array<i64: 1, 128>}, {transform_indices = @transform_3, window_bounds = array<i64: 32, 128>}]} {
    %c0 = arith.constant 0 : index
    %c0_0 = arith.constant 0 : index
    %0 = vector.load %arg1[%c0, %c0_0] : memref<32x128xf32, #tpu.memory_space<vmem>>, vector<32x128xf32>
    %c0_1 = arith.constant 0 : index
    %c0_2 = arith.constant 0 : index
    %1 = vector.load %arg2[%c0_1, %c0_2] : memref<128x128xbf16, #tpu.memory_space<vmem>>, vector<128x128xbf16>
    %2 = arith.truncf %0 : vector<32x128xf32> to vector<32x128xbf16>
    %3 = arith.extf %2 : vector<32x128xbf16> to vector<32x128xf32>
    %4 = arith.subf %0, %3 : vector<32x128xf32>
    %5 = arith.truncf %4 : vector<32x128xf32> to vector<32x128xbf16>
    %cst = arith.constant dense<0.000000e+00> : vector<32x128xf32>
    %6 = tpu.matmul %2, %1, %cst {dimension_numbers = #tpu.dot_dimension_numbers<[1], [0], [0], [1], [0, 0, 1, 1], [], []>} : vector<32x128xbf16>, vector<128x128xbf16>, vector<32x128xf32> -> vector<32x128xf32>
    %cst_3 = arith.constant dense<0.000000e+00> : vector<32x128xf32>
    %7 = tpu.matmul %5, %1, %cst_3 {dimension_numbers = #tpu.dot_dimension_numbers<[1], [0], [0], [1], [0, 0, 1, 1], [], []>} : vector<32x128xbf16>, vector<128x128xbf16>, vector<32x128xf32> -> vector<32x128xf32>
    %8 = arith.addf %6, %7 : vector<32x128xf32>
    %cst_4 = arith.constant 3.125000e-02 : f32
    %9 = vector.broadcast %cst_4 : f32 to vector<32x128xf32>
    %10 = arith.mulf %8, %9 : vector<32x128xf32>
    %11 = arith.subf %0, %10 : vector<32x128xf32>
    %12 = arith.mulf %11, %11 : vector<32x128xf32>
    %13 = arith.truncf %12 : vector<32x128xf32> to vector<32x128xbf16>
    %14 = arith.extf %13 : vector<32x128xbf16> to vector<32x128xf32>
    %15 = arith.subf %12, %14 : vector<32x128xf32>
    %16 = arith.truncf %15 : vector<32x128xf32> to vector<32x128xbf16>
    %cst_5 = arith.constant dense<0.000000e+00> : vector<32x128xf32>
    %17 = tpu.matmul %13, %1, %cst_5 {dimension_numbers = #tpu.dot_dimension_numbers<[1], [0], [0], [1], [0, 0, 1, 1], [], []>} : vector<32x128xbf16>, vector<128x128xbf16>, vector<32x128xf32> -> vector<32x128xf32>
    %cst_6 = arith.constant dense<0.000000e+00> : vector<32x128xf32>
    %18 = tpu.matmul %16, %1, %cst_6 {dimension_numbers = #tpu.dot_dimension_numbers<[1], [0], [0], [1], [0, 0, 1, 1], [], []>} : vector<32x128xbf16>, vector<128x128xbf16>, vector<32x128xf32> -> vector<32x128xf32>
    %19 = arith.addf %17, %18 : vector<32x128xf32>
    %cst_7 = arith.constant 3.125000e-02 : f32
    %20 = vector.broadcast %cst_7 : f32 to vector<32x128xf32>
    %21 = arith.mulf %19, %20 : vector<32x128xf32>
    %cst_8 = arith.constant 0.000000e+00 : f32
    %22 = vector.broadcast %cst_8 : f32 to vector<32x128xf32>
    %23 = arith.maximumf %21, %22 : vector<32x128xf32>
    %cst_9 = arith.constant 9.99999974E-6 : f32
    %24 = vector.broadcast %cst_9 : f32 to vector<32x128xf32>
    %25 = arith.addf %23, %24 : vector<32x128xf32>
    %26 = math.rsqrt %25 : vector<32x128xf32>
    %c0_10 = arith.constant 0 : index
    %c0_11 = arith.constant 0 : index
    %27 = vector.load %arg3[%c0_10, %c0_11] : memref<1x128xf32, #tpu.memory_space<vmem>>, vector<1x128xf32>
    %28 = arith.mulf %0, %26 : vector<32x128xf32>
    %29 = vector.broadcast %27 : vector<1x128xf32> to vector<32x128xf32>
    %30 = arith.mulf %28, %29 : vector<32x128xf32>
    %c0_12 = arith.constant 0 : index
    %c0_13 = arith.constant 0 : index
    %31 = vector.load %arg4[%c0_12, %c0_13] : memref<32x128xf32, #tpu.memory_space<vmem>>, vector<32x128xf32>
    tpu.vector_store %arg4[%c0_12, %c0_13], %30 {strides = array<i32>} : memref<32x128xf32, #tpu.memory_space<vmem>>, vector<32x128xf32>,
    return
  }
  func.func @transform_0(%arg0: i32) -> (i32, i32) {
    %c0_i32 = arith.constant 0 : i32
    %c0_i32_0 = arith.constant 0 : i32
    return %arg0, %c0_i32 : i32, i32
  }
  func.func @transform_1(%arg0: i32) -> (i32, i32) {
    %c0_i32 = arith.constant 0 : i32
    %c0_i32_0 = arith.constant 0 : i32
    %c0_i32_1 = arith.constant 0 : i32
    return %c0_i32, %c0_i32_0 : i32, i32
  }
  func.func @transform_2(%arg0: i32) -> (i32, i32) {
    %c0_i32 = arith.constant 0 : i32
    %c0_i32_0 = arith.constant 0 : i32
    %c0_i32_1 = arith.constant 0 : i32
    return %c0_i32, %c0_i32_0 : i32, i32
  }
  func.func @transform_3(%arg0: i32) -> (i32, i32) {
    %c0_i32 = arith.constant 0 : i32
    %c0_i32_0 = arith.constant 0 : i32
    return %arg0, %c0_i32 : i32, i32
  }
}

</mosaic_0001>

<llo_original>
// kernel: tpu_custom_call.1
$region0: #{tpu_custom_call.1}
  #allocation0 [shape = 'u32[]', space=smem, size = 0x4, offset = 0x4, fixed_abs, tag = 'smem constant byte address 0x4 - core index']
  #allocation1 [shape = 'u32[144,128]{1,0:T(1,128)}', space=vmem, size = 0x12000, scoped, tag = 'internal scratch']
  %s0 = inlined_call_operand.hbm [shape: f32[32,128], index: 0, kind: input, shape index: {}]
  %s1 = inlined_call_operand.hbm [shape: bf16[128,128], index: 1, kind: input, shape index: {}]
  %s2 = inlined_call_operand.vmem [shape: f32[1,128], index: 2, kind: input, shape index: {}]
  %s3 = inlined_call_operand.hbm [shape: f32[32,128], index: 3, kind: output, shape index: {}]
  %s4 = sld [smem:[#allocation0]]
  $region30: #{tpu_custom_call.1} parent=0
    _
  %s6 = ssub.s32 1, %s4
  %s7 = scalar_select 0, %s6, %s4
  $region1: #{tpu_custom_call.1} parent=0
    #allocation2 [shape = 'u8[16384]{0}', space=vmem, size = 0x4000, scoped, tag = 'input window, operand 0, single buffered']
    #allocation3 [shape = 's32[1]{0}', space=sflag, size = 0x4, scoped, tag = 'scoped memory for tpu_custom_call.1']
    #allocation4 [shape = 's32[1]{0}', space=sflag, size = 0x4, scoped, tag = 'scoped memory for tpu_custom_call.1']
    #allocation5 [shape = 'u8[32768]{0}', space=vmem, size = 0x8000, scoped, tag = 'input window, operand 1, single buffered']
    #allocation6 [shape = 's32[1]{0}', space=sflag, size = 0x4, scoped, tag = 'scoped memory for tpu_custom_call.1']
    #allocation7 [shape = 'u8[16384]{0}', space=vmem, size = 0x4000, scoped, tag = 'output window, operand 0, single buffered']
    %8 = vsyncpa [#allocation3], 0
    %9 = vsyncpa [#allocation6], 0
    %10 = vsyncpa [#allocation4], 0
    // Predicated region
    $region2: #{tpu_custom_call.1} parent=1 // pred_check
      _
    $region3: #{tpu_custom_call.1} parent=1 // pred_check_branch
      %12 = sbr.rel (0) target = $region5
    $region4: #{tpu_custom_call.1} parent=1 // pred_region
      %s14 = ssub.s32 512, 512
      %15 = vsyncadd [#allocation3], %s14
      %s16 = sshll.u32 [#allocation2], 4
      %s17 = int_to_ptr.vmem [resolvable:$true] %s16
      %22 = dma.hbm_to_vmem [thread:$0]  %s0, 512, %s17, [#allocation3], 128, 128, 8
    $region5: #{tpu_custom_call.1} parent=1 // pred_fallthru
      _
    // Predicated region
    $region6: #{tpu_custom_call.1} parent=1 // pred_check
      _
    $region7: #{tpu_custom_call.1} parent=1 // pred_check_branch
      %24 = sbr.rel (0) target = $region9
    $region8: #{tpu_custom_call.1} parent=1 // pred_region
      %s26 = ssub.s32 1024, 1024
      %27 = vsyncadd [#allocation6], %s26
      %s28 = sshll.u32 [#allocation5], 4
      %s29 = int_to_ptr.vmem [resolvable:$true] %s28
      %34 = dma.hbm_to_vmem [thread:$0]  %s1, 1024, %s29, [#allocation6], 64, 64, 4
    $region9: #{tpu_custom_call.1} parent=1 // pred_fallthru
      _
    // Predicated region
    $region10: #{tpu_custom_call.1} parent=1 // pred_check
      _
    $region11: #{tpu_custom_call.1} parent=1 // pred_check_branch
      %36 = sbr.rel (0) target = $region13
    $region12: #{tpu_custom_call.1} parent=1 // pred_region
      _
    $region13: #{tpu_custom_call.1} parent=1 // pred_fallthru
      _
    // Predicated region
    $region14: #{tpu_custom_call.1} parent=1 // pred_check
      _
    $region15: #{tpu_custom_call.1} parent=1 // pred_check_branch
      %38 = sbr.rel (0) target = $region17
    $region16: #{tpu_custom_call.1} parent=1 // pred_region
      %39 = dma.done [#allocation3], 512
    $region17: #{tpu_custom_call.1} parent=1 // pred_fallthru
      _
    // Predicated region
    $region18: #{tpu_custom_call.1} parent=1 // pred_check
      _
    $region19: #{tpu_custom_call.1} parent=1 // pred_check_branch
      %41 = sbr.rel (0) target = $region21
    $region20: #{tpu_custom_call.1} parent=1 // pred_region
      %42 = dma.done [#allocation6], 1024
    $region21: #{tpu_custom_call.1} parent=1 // pred_fallthru
      _
    %v44 = vld [vmem:[#allocation2] sm:$0xff]
    %v45 = vld [vmem:[#allocation2 + $0x8] sm:$0xff]
    %v46 = vld [vmem:[#allocation2 + $0x10] sm:$0xff]
    %v47 = vld [vmem:[#allocation2 + $0x18] sm:$0xff]
    %v48 = vld [vmem:[#allocation5] sm:$0xf]
    %v49 = vld [vmem:[#allocation5 + $0x4] sm:$0xf]
    %v50 = vld [vmem:[#allocation5 + $0x8] sm:$0xf]
    %v51 = vld [vmem:[#allocation5 + $0xc] sm:$0xf]
    %v52 = vld [vmem:[#allocation5 + $0x10] sm:$0xf]
    %v53 = vld [vmem:[#allocation5 + $0x14] sm:$0xf]
    %v54 = vld [vmem:[#allocation5 + $0x18] sm:$0xf]
    %v55 = vld [vmem:[#allocation5 + $0x1c] sm:$0xf]
    %v56 = vld [vmem:[#allocation5 + $0x20] sm:$0xf]
    %v57 = vld [vmem:[#allocation5 + $0x24] sm:$0xf]
    %v58 = vld [vmem:[#allocation5 + $0x28] sm:$0xf]
    %v59 = vld [vmem:[#allocation5 + $0x2c] sm:$0xf]
    %v60 = vld [vmem:[#allocation5 + $0x30] sm:$0xf]
    %v61 = vld [vmem:[#allocation5 + $0x34] sm:$0xf]
    %v62 = vld [vmem:[#allocation5 + $0x38] sm:$0xf]
    %v63 = vld [vmem:[#allocation5 + $0x3c] sm:$0xf]
    %v64 = vpack.c.bf16 %v45, %v44
    %v65 = vpack.c.bf16 %v47, %v46
    %v66 = vunpack.c.l.bf16 %v64
    %v67 = vunpack.c.h.bf16 %v64
    %v68 = vunpack.c.l.bf16 %v65
    %v69 = vunpack.c.h.bf16 %v65
    %v70 = vsub.f32 %v44, %v66
    %v71 = vsub.f32 %v45, %v67
    %v72 = vsub.f32 %v46, %v68
    %v73 = vsub.f32 %v47, %v69
    %v74 = vpack.c.bf16 %v71, %v70
    %v75 = vpack.c.bf16 %v73, %v72
    %v92 = vunpack.c.l.b16 %v48
    %v93 = vunpack.c.l.b16 %v49
    %v94 = vunpack.c.l.b16 %v50
    %v95 = vunpack.c.l.b16 %v51
    %v96 = vunpack.c.l.b16 %v52
    %v97 = vunpack.c.l.b16 %v53
    %v98 = vunpack.c.l.b16 %v54
    %v99 = vunpack.c.l.b16 %v55
    %v100 = vunpack.c.l.b16 %v56
    %v101 = vunpack.c.l.b16 %v57
    %v102 = vunpack.c.l.b16 %v58
    %v103 = vunpack.c.l.b16 %v59
    %v104 = vunpack.c.l.b16 %v60
    %v105 = vunpack.c.l.b16 %v61
    %v106 = vunpack.c.l.b16 %v62
    %v107 = vunpack.c.l.b16 %v63
    %v108 = vpack.c.b16 %v93, %v92
    %v109 = vpack.c.b16 %v95, %v94
    %v110 = vpack.c.b16 %v97, %v96
    %v111 = vpack.c.b16 %v99, %v98
    %v112 = vpack.c.b16 %v101, %v100
    %v113 = vpack.c.b16 %v103, %v102
    %v114 = vpack.c.b16 %v105, %v104
    %v115 = vpack.c.b16 %v107, %v106
    %124 = vmatprep.subr.bf16.mxu0 0
    %125 = vmatpush1.bf16.msra.mxu0 %v108
    %126 = vmatprep.subr.bf16.mxu0 0
    %127 = vmatpush1.bf16.msra.mxu0 %v109
    %128 = vmatprep.subr.bf16.mxu0 0
    %129 = vmatpush1.bf16.msra.mxu0 %v110
    %130 = vmatprep.subr.bf16.mxu0 0
    %131 = vmatpush1.bf16.msra.mxu0 %v111
    %132 = vmatprep.subr.bf16.mxu0 0
    %133 = vmatpush1.bf16.msra.mxu0 %v112
    %134 = vmatprep.subr.bf16.mxu0 0
    %135 = vmatpush1.bf16.msra.mxu0 %v113
    %136 = vmatprep.subr.bf16.mxu0 0
    %137 = vmatpush1.bf16.msra.mxu0 %v114
    %138 = vmatprep.subr.bf16.mxu0 0
    %139 = vmatpush1.bf16.msra.mxu0 %v115
    %140 = vmatprep.subr.bf16.mxu0 0
    %141 = vmatpush1.bf16.msra.mxu0 0
    %142 = vmatprep.subr.bf16.mxu0 0
    %143 = vmatpush1.bf16.msra.mxu0 0
    %144 = vmatprep.subr.bf16.mxu0 0
    %145 = vmatpush1.bf16.msra.mxu0 0
    %146 = vmatprep.subr.bf16.mxu0 0
    %147 = vmatpush1.bf16.msra.mxu0 0
    %148 = vmatprep.subr.bf16.mxu0 0
    %149 = vmatpush1.bf16.msra.mxu0 0
    %150 = vmatprep.subr.bf16.mxu0 0
    %151 = vmatpush1.bf16.msra.mxu0 0
    %152 = vmatprep.subr.bf16.mxu0 0
    %153 = vmatpush1.bf16.msra.mxu0 0
    %154 = vmatprep.subr.bf16.mxu0 0
    %155 = vmatpush1.bf16.msra.mxu0 0
    %156 = vmatprep.mubr.bf16.mxu0 0
    %157 = vmatmul.mubr.bf16.gmra.mrb[0].mxu0 %v74
    %v158 = vpop.f32.mrb[0].mxu0
    %v159 = vadd.f32 0.0, %v158
    %v160 = vpop.f32.mrb[0].mxu0
    %v161 = vpop.f32.mrb[0].mxu0
    %v162 = vadd.f32 0.0, %v161
    %v163 = vpop.f32.mrb[0].mxu0
    %164 = vmatprep.mubr.bf16.mxu0 0
    %165 = vmatmul.mubr.bf16.gmra.mrb[0].mxu0 %v75
    %v166 = vpop.f32.mrb[0].mxu0
    %v167 = vadd.f32 0.0, %v166
    %v168 = vpop.f32.mrb[0].mxu0
    %v169 = vpop.f32.mrb[0].mxu0
    %v170 = vadd.f32 0.0, %v169
    %v171 = vpop.f32.mrb[0].mxu0
    %172 = vdwg.mxu0
    %173 = vmatprep.subr.bf16.mxu0 0
    %174 = vmatpush1.bf16.msra.mxu0 %v108
    %175 = vmatprep.subr.bf16.mxu0 0
    %176 = vmatpush1.bf16.msra.mxu0 %v109
    %177 = vmatprep.subr.bf16.mxu0 0
    %178 = vmatpush1.bf16.msra.mxu0 %v110
    %179 = vmatprep.subr.bf16.mxu0 0
    %180 = vmatpush1.bf16.msra.mxu0 %v111
    %181 = vmatprep.subr.bf16.mxu0 0
    %182 = vmatpush1.bf16.msra.mxu0 %v112
    %183 = vmatprep.subr.bf16.mxu0 0
    %184 = vmatpush1.bf16.msra.mxu0 %v113
    %185 = vmatprep.subr.bf16.mxu0 0
    %186 = vmatpush1.bf16.msra.mxu0 %v114
    %187 = vmatprep.subr.bf16.mxu0 0
    %188 = vmatpush1.bf16.msra.mxu0 %v115
    %189 = vmatprep.subr.bf16.mxu0 0
    %190 = vmatpush1.bf16.msra.mxu0 0
    %191 = vmatprep.subr.bf16.mxu0 0
    %192 = vmatpush1.bf16.msra.mxu0 0
    %193 = vmatprep.subr.bf16.mxu0 0
    %194 = vmatpush1.bf16.msra.mxu0 0
    %195 = vmatprep.subr.bf16.mxu0 0
    %196 = vmatpush1.bf16.msra.mxu0 0
    %197 = vmatprep.subr.bf16.mxu0 0
    %198 = vmatpush1.bf16.msra.mxu0 0
    %199 = vmatprep.subr.bf16.mxu0 0
    %200 = vmatpush1.bf16.msra.mxu0 0
    %201 = vmatprep.subr.bf16.mxu0 0
    %202 = vmatpush1.bf16.msra.mxu0 0
    %203 = vmatprep.subr.bf16.mxu0 0
    %204 = vmatpush1.bf16.msra.mxu0 0
    %205 = vmatprep.mubr.bf16.mxu0 0
    %206 = vmatmul.mubr.bf16.gmra.mrb[0].mxu0 %v64
    %v207 = vpop.f32.mrb[0].mxu0
    %v208 = vadd.f32 %v159, %v207
    %v209 = vpop.f32.mrb[0].mxu0
    %v210 = vpop.f32.mrb[0].mxu0
    %v211 = vadd.f32 %v162, %v210
    %v212 = vpop.f32.mrb[0].mxu0
    %213 = vmatprep.mubr.bf16.mxu0 0
    %214 = vmatmul.mubr.bf16.gmra.mrb[0].mxu0 %v65
    %v215 = vpop.f32.mrb[0].mxu0
    %v216 = vadd.f32 %v167, %v215
    %v217 = vpop.f32.mrb[0].mxu0
    %v218 = vpop.f32.mrb[0].mxu0
    %v219 = vadd.f32 %v170, %v218
    %v220 = vpop.f32.mrb[0].mxu0
    %221 = vdwg.mxu0
    %v222 = vmul.f32 %v208, 0.03125
    %v223 = vmul.f32 %v211, 0.03125
    %v224 = vmul.f32 %v216, 0.03125
    %v225 = vmul.f32 %v219, 0.03125
    %v226 = vsub.f32 %v44, %v222
    %v227 = vsub.f32 %v45, %v223
    %v228 = vsub.f32 %v46, %v224
    %v229 = vsub.f32 %v47, %v225
    %v230 = vmul.f32 %v226, %v226
    %v231 = vmul.f32 %v227, %v227
    %v232 = vmul.f32 %v228, %v228
    %v233 = vmul.f32 %v229, %v229
    %v234 = vpack.c.bf16 %v231, %v230
    %v235 = vpack.c.bf16 %v233, %v232
    %v236 = vunpack.c.l.bf16 %v234
    %v237 = vunpack.c.h.bf16 %v234
    %v238 = vunpack.c.l.bf16 %v235
    %v239 = vunpack.c.h.bf16 %v235
    %v240 = vsub.f32 %v230, %v236
    %v241 = vsub.f32 %v231, %v237
    %v242 = vsub.f32 %v232, %v238
    %v243 = vsub.f32 %v233, %v239
    %v244 = vpack.c.bf16 %v241, %v240
    %v245 = vpack.c.bf16 %v243, %v242
    %246 = vmatprep.subr.bf16.mxu0 0
    %247 = vmatpush1.bf16.msra.mxu0 %v108
    %248 = vmatprep.subr.bf16.mxu0 0
    %249 = vmatpush1.bf16.msra.mxu0 %v109
    %250 = vmatprep.subr.bf16.mxu0 0
    %251 = vmatpush1.bf16.msra.mxu0 %v110
    %252 = vmatprep.subr.bf16.mxu0 0
    %253 = vmatpush1.bf16.msra.mxu0 %v111
    %254 = vmatprep.subr.bf16.mxu0 0
    %255 = vmatpush1.bf16.msra.mxu0 %v112
    %256 = vmatprep.subr.bf16.mxu0 0
    %257 = vmatpush1.bf16.msra.mxu0 %v113
    %258 = vmatprep.subr.bf16.mxu0 0
    %259 = vmatpush1.bf16.msra.mxu0 %v114
    %260 = vmatprep.subr.bf16.mxu0 0
    %261 = vmatpush1.bf16.msra.mxu0 %v115
    %262 = vmatprep.subr.bf16.mxu0 0
    %263 = vmatpush1.bf16.msra.mxu0 0
    %264 = vmatprep.subr.bf16.mxu0 0
    %265 = vmatpush1.bf16.msra.mxu0 0
    %266 = vmatprep.subr.bf16.mxu0 0
    %267 = vmatpush1.bf16.msra.mxu0 0
    %268 = vmatprep.subr.bf16.mxu0 0
    %269 = vmatpush1.bf16.msra.mxu0 0
    %270 = vmatprep.subr.bf16.mxu0 0
    %271 = vmatpush1.bf16.msra.mxu0 0
    %272 = vmatprep.subr.bf16.mxu0 0
    %273 = vmatpush1.bf16.msra.mxu0 0
    %274 = vmatprep.subr.bf16.mxu0 0
    %275 = vmatpush1.bf16.msra.mxu0 0
    %276 = vmatprep.subr.bf16.mxu0 0
    %277 = vmatpush1.bf16.msra.mxu0 0
    %278 = vmatprep.mubr.bf16.mxu0 0
    %279 = vmatmul.mubr.bf16.gmra.mrb[0].mxu0 %v244
    %v280 = vpop.f32.mrb[0].mxu0
    %v281 = vadd.f32 0.0, %v280
    %v282 = vpop.f32.mrb[0].mxu0
    %v283 = vpop.f32.mrb[0].mxu0
    %v284 = vadd.f32 0.0, %v283
    %v285 = vpop.f32.mrb[0].mxu0
    %286 = vmatprep.mubr.bf16.mxu0 0
    %287 = vmatmul.mubr.bf16.gmra.mrb[0].mxu0 %v245
    %v288 = vpop.f32.mrb[0].mxu0
    %v289 = vadd.f32 0.0, %v288
    %v290 = vpop.f32.mrb[0].mxu0
    %v291 = vpop.f32.mrb[0].mxu0
    %v292 = vadd.f32 0.0, %v291
    %v293 = vpop.f32.mrb[0].mxu0
    %294 = vdwg.mxu0
    %295 = vmatprep.subr.bf16.mxu0 0
    %296 = vmatpush1.bf16.msra.mxu0 %v108
    %297 = vmatprep.subr.bf16.mxu0 0
    %298 = vmatpush1.bf16.msra.mxu0 %v109
    %299 = vmatprep.subr.bf16.mxu0 0
    %300 = vmatpush1.bf16.msra.mxu0 %v110
    %301 = vmatprep.subr.bf16.mxu0 0
    %302 = vmatpush1.bf16.msra.mxu0 %v111
    %303 = vmatprep.subr.bf16.mxu0 0
    %304 = vmatpush1.bf16.msra.mxu0 %v112
    %305 = vmatprep.subr.bf16.mxu0 0
    %306 = vmatpush1.bf16.msra.mxu0 %v113
    %307 = vmatprep.subr.bf16.mxu0 0
    %308 = vmatpush1.bf16.msra.mxu0 %v114
    %309 = vmatprep.subr.bf16.mxu0 0
    %310 = vmatpush1.bf16.msra.mxu0 %v115
    %311 = vmatprep.subr.bf16.mxu0 0
    %312 = vmatpush1.bf16.msra.mxu0 0
    %313 = vmatprep.subr.bf16.mxu0 0
    %314 = vmatpush1.bf16.msra.mxu0 0
    %315 = vmatprep.subr.bf16.mxu0 0
    %316 = vmatpush1.bf16.msra.mxu0 0
    %317 = vmatprep.subr.bf16.mxu0 0
    %318 = vmatpush1.bf16.msra.mxu0 0
    %319 = vmatprep.subr.bf16.mxu0 0
    %320 = vmatpush1.bf16.msra.mxu0 0
    %321 = vmatprep.subr.bf16.mxu0 0
    %322 = vmatpush1.bf16.msra.mxu0 0
    %323 = vmatprep.subr.bf16.mxu0 0
    %324 = vmatpush1.bf16.msra.mxu0 0
    %325 = vmatprep.subr.bf16.mxu0 0
    %326 = vmatpush1.bf16.msra.mxu0 0
    %327 = vmatprep.mubr.bf16.mxu0 0
    %328 = vmatmul.mubr.bf16.gmra.mrb[0].mxu0 %v234
    %v329 = vpop.f32.mrb[0].mxu0
    %v330 = vadd.f32 %v281, %v329
    %v331 = vpop.f32.mrb[0].mxu0
    %v332 = vpop.f32.mrb[0].mxu0
    %v333 = vadd.f32 %v284, %v332
    %v334 = vpop.f32.mrb[0].mxu0
    %335 = vmatprep.mubr.bf16.mxu0 0
    %336 = vmatmul.mubr.bf16.gmra.mrb[0].mxu0 %v235
    %v337 = vpop.f32.mrb[0].mxu0
    %v338 = vadd.f32 %v289, %v337
    %v339 = vpop.f32.mrb[0].mxu0
    %v340 = vpop.f32.mrb[0].mxu0
    %v341 = vadd.f32 %v292, %v340
    %v342 = vpop.f32.mrb[0].mxu0
    %343 = vdwg.mxu0
    %v344 = vmul.f32 %v330, 0.03125
    %v345 = vmul.f32 %v333, 0.03125
    %v346 = vmul.f32 %v338, 0.03125
    %v347 = vmul.f32 %v341, 0.03125
    %v348 = vmax.f32 %v344, 0.0
    %v349 = vmax.f32 %v345, 0.0
    %v350 = vmax.f32 %v346, 0.0
    %v351 = vmax.f32 %v347, 0.0
    %v352 = vadd.f32 %v348, 1e-05
    %v353 = vadd.f32 %v349, 1e-05
    %v354 = vadd.f32 %v350, 1e-05
    %v355 = vadd.f32 %v351, 1e-05
    %v356 = vrsqrt.pop %v352
    %v357 = vrsqrt.pop %v353
    %v358 = vrsqrt.pop %v354
    %v359 = vrsqrt.pop %v355
    %v360 = vld [vmem:[%s2] sm:$0x1]
    %v361 = vmul.f32 %v44, %v356
    %v362 = vmul.f32 %v45, %v357
    %v363 = vmul.f32 %v46, %v358
    %v364 = vmul.f32 %v47, %v359
    %v366 = vlaneseq
    %v367 = vshrl.u32 %v366, 7
    %v368 = vsub.s32 0, %v367
    %v369 = vrot.slane %v360, %v368
    %v371 = vmul.f32 %v361, %v369
    %v372 = vmul.f32 %v362, %v369
    %v373 = vmul.f32 %v363, %v369
    %v374 = vmul.f32 %v364, %v369
    %375 = vst [vmem:[#allocation7] sm:$0xff] %v371
    %376 = vst [vmem:[#allocation7 + $0x8] sm:$0xff] %v372
    %377 = vst [vmem:[#allocation7 + $0x10] sm:$0xff] %v373
    %378 = vst [vmem:[#allocation7 + $0x18] sm:$0xff] %v374
    // Predicated region
    $region22: #{tpu_custom_call.1} parent=1 // pred_check
      _
    $region23: #{tpu_custom_call.1} parent=1 // pred_check_branch
      %380 = sbr.rel (0) target = $region25
    $region24: #{tpu_custom_call.1} parent=1 // pred_region
      %s382 = ssub.s32 512, 512
      %383 = vsyncadd [#allocation4], %s382
      %s384 = sshll.u32 [#allocation7], 4
      %s385 = int_to_ptr.vmem [resolvable:$true] %s384
      %390 = dma.vmem_to_hbm [thread:$0]  %s385, 512, %s3, [#allocation4], 128, 128, 8
    $region25: #{tpu_custom_call.1} parent=1 // pred_fallthru
      _
    // Predicated region
    $region26: #{tpu_custom_call.1} parent=1 // pred_check
      _
    $region27: #{tpu_custom_call.1} parent=1 // pred_check_branch
      %392 = sbr.rel (0) target = $region29
    $region28: #{tpu_custom_call.1} parent=1 // pred_region
      %393 = dma.done [#allocation4], 512
    $region29: #{tpu_custom_call.1} parent=1 // pred_fallthru
      _
    %394 = vsyncpa [#allocation3], 1
    %395 = vsyncpa [#allocation6], 1
    %396 = vsyncpa [#allocation4], 1

</llo_original>
